<compile_context>
chip_gen: v5e
topology: v5e:2x2
jax: 0.10.0
libtpu: 0.0.40
codegen_flags: <defaults>
</compile_context>

<pallas_src>
import jax
import jax.numpy as jnp
from jax.experimental import pallas as pl
from jax.experimental.pallas import tpu as pltpu

BN_EPS = 1e-5

_TILE_VMEM_BUDGET = 16 * 1024 * 1024   # target for double-buffered in+out tiles (bytes)
_MAX_TILE_L = 4096                     # cap tile length (safe on v7x 64 MiB VMEM)
_VMEM_LIMIT = 32 * 1024 * 1024         # scoped VMEM request (<= physical on all gens)


def _pick_tile_l(L, c_in, c_out, max_tile_l=None):
    """Largest multiple of 128 that divides L and fits the VMEM tile budget.

    Falls back to the full L when no such divisor exists (small / odd L)."""
    bytes_per_lane = 2 * 4 * (c_in + c_out)          # 2 pipeline buffers, f32 in + out
    cap = (_TILE_VMEM_BUDGET // bytes_per_lane) // 128 * 128
    cap = max(128, min(cap, _MAX_TILE_L))
    if max_tile_l is not None:
        cap = min(cap, max_tile_l)
    best = None
    t = 128
    while t <= min(L, cap):
        if L % t == 0:
            best = t
        t += 128
    return best if best is not None else L


def _matmul_cout_l(w, x):
    # (Cout, Cin) . (Cin, TILE_L) -> (Cout, TILE_L) on the MXU, f32 accumulate.
    return jax.lax.dot_general(
        w, x, dimension_numbers=(((1,), (0,)), ((), ())),
        preferred_element_type=jnp.float32)


def _stats_kernel(x_ref, w_ref, sum_ref, sq_ref):
    """Phase 1: per-channel sum / sum-of-squares of y = W @ x, accumulated over L tiles."""
    @pl.when(pl.program_id(1) == 0)
    def _init():
        sum_ref[...] = jnp.zeros_like(sum_ref)
        sq_ref[...] = jnp.zeros_like(sq_ref)

    y = _matmul_cout_l(w_ref[...], x_ref[...])          # (Cout, TILE_L)
    sum_ref[...] += jnp.sum(y, axis=1, keepdims=True)   # (Cout, 1)
    sq_ref[...] += jnp.sum(y * y, axis=1, keepdims=True)


def _normalize_kernel(x_ref, w_ref, scale_ref, shift_ref, o_ref):
    """Phase 2: recompute y = W @ x and apply folded BN affine (one FMA) + ReLU."""
    y = _matmul_cout_l(w_ref[...], x_ref[...])                        # (Cout, TILE_L)
    o_ref[...] = jnp.maximum(y * scale_ref[...] + shift_ref[...], 0.0).astype(o_ref.dtype)


def linear1layer_forward(x_ncl, weight, bias, gamma, beta, max_tile_l=None):
    """Fused Conv1d(k=1) -> BatchNorm1d(training batch stats) -> ReLU.

    x_ncl:  (B, Cin, L) float32 in PyTorch NCL layout.
    weight: (Cout, Cin)  Conv1d weight with the k=1 axis squeezed.
    bias:   (Cout,)      accepted for API parity; training-mode BN subtracts the batch
                         mean which cancels a per-channel bias exactly, so it is unused.
    gamma, beta: (Cout,) BatchNorm affine parameters.
    Returns (B, Cout, L) float32.
    """
    del bias  # exactly cancelled by BN mean subtraction

    B, Cin, L = x_ncl.shape
    Cout = weight.shape[0]
    tile_l = _pick_tile_l(L, Cin, Cout, max_tile_l)
    n_tiles = L // tile_l
    grid = (B, n_tiles)

    x_spec = pl.BlockSpec((None, Cin, tile_l), lambda b, t: (b, 0, t))
    w_spec = pl.BlockSpec((Cout, Cin), lambda b, t: (0, 0))
    stat_spec = pl.BlockSpec((None, Cout, 1), lambda b, t: (b, 0, 0))

    # ---- Phase 1: per-batch-row partial channel statistics (parallel over B) ----------
    sum_p, sq_p = pl.pallas_call(
        _stats_kernel,
        out_shape=(jax.ShapeDtypeStruct((B, Cout, 1), jnp.float32),
                   jax.ShapeDtypeStruct((B, Cout, 1), jnp.float32)),
        grid=grid,
        in_specs=[x_spec, w_spec],
        out_specs=[stat_spec, stat_spec],
        compiler_params=pltpu.CompilerParams(
            dimension_semantics=("parallel", "arbitrary"),
            vmem_limit_bytes=_VMEM_LIMIT),
    )(x_ncl, weight)

    # ---- Phase boundary: finalize BN scale/shift once (tiny Cout-sized math) ----------
    n_total = jnp.float32(B * L)
    s = jnp.sum(sum_p, axis=0)[:, 0]                       # (Cout,)
    sq = jnp.sum(sq_p, axis=0)[:, 0]                       # (Cout,)
    mean = s / n_total
    var = jnp.maximum(sq / n_total - mean * mean, 0.0)
    inv_std = jax.lax.rsqrt(var + BN_EPS)
    scale = (gamma * inv_std).reshape(Cout, 1).astype(jnp.float32)
    shift = (beta - mean * gamma * inv_std).reshape(Cout, 1).astype(jnp.float32)

    # ---- Phase 2: normalize + ReLU with lane-dense (Cout, TILE_L) output blocks -------
    out = pl.pallas_call(
        _normalize_kernel,
        out_shape=jax.ShapeDtypeStruct((B, Cout, L), jnp.float32),
        grid=grid,
        in_specs=[x_spec, w_spec,
                  pl.BlockSpec((Cout, 1), lambda b, t: (0, 0)),
                  pl.BlockSpec((Cout, 1), lambda b, t: (0, 0))],
        out_specs=pl.BlockSpec((None, Cout, tile_l), lambda b, t: (b, 0, t)),
        compiler_params=pltpu.CompilerParams(
            dimension_semantics=("parallel", "parallel"),
            vmem_limit_bytes=_VMEM_LIMIT),
    )(x_ncl, weight, scale, shift)
    return out


def _reference(x_ncl, weight, bias, gamma, beta):
    # Pure-JAX reference mirroring PyTorch Conv1d(k=1) + BatchNorm1d(train) + ReLU.
    y = jnp.einsum("bcl,oc->bol", x_ncl, weight) + bias[None, :, None]
    mean = jnp.mean(y, axis=(0, 2), keepdims=True)
    var = jnp.mean((y - mean) ** 2, axis=(0, 2), keepdims=True)
    y = (y - mean) / jnp.sqrt(var + BN_EPS)
    y = y * gamma[None, :, None] + beta[None, :, None]
    return jnp.maximum(y, 0.0)


if __name__ == "__main__":
    def run_case(B, Cin, Cout, L, max_tile_l=None, seed=0):
        key = jax.random.PRNGKey(seed)
        k_x, k_w, k_b = jax.random.split(key, 3)
        x = jax.random.normal(k_x, (B, Cin, L), dtype=jnp.float32)
        # Conv1d-style init (weight shape (Cout, Cin, 1) with k squeezed).
        bound = 1.0 / (Cin ** 0.5)
        weight = jax.random.uniform(k_w, (Cout, Cin), minval=-bound, maxval=bound,
                                    dtype=jnp.float32)
        bias = jax.random.uniform(k_b, (Cout,), minval=-bound, maxval=bound,
                                  dtype=jnp.float32)
        gamma = jnp.ones((Cout,), dtype=jnp.float32)   # BatchNorm1d default weight
        beta = jnp.zeros((Cout,), dtype=jnp.float32)   # BatchNorm1d default bias

        out = linear1layer_forward(x, weight, bias, gamma, beta, max_tile_l=max_tile_l)
        out = jax.block_until_ready(out)
        ref = _reference(x, weight, bias, gamma, beta)
        assert out.shape == (B, Cout, L)
        err = float(jnp.max(jnp.abs(out - ref)))
        assert jnp.allclose(out, ref, atol=1e-4, rtol=1e-4), err

    # Small case (blocks == full extents).
    run_case(2, 4, 8, 16)
    # Multi-tile case: exercises the two-phase stats accumulation across L tiles.
    run_case(2, 4, 8, 256, max_tile_l=128, seed=1)

    print("KERNEL_OK")
</pallas_src>

<mosaic_0001>
module attributes {stable_mosaic.version = 11 : i64} {
  func.func @_stats_kernel(%arg0: i32, %arg1: i32, %arg2: memref<1x4x16xf32, #tpu.memory_space<vmem>>, %arg3: memref<8x4xf32, #tpu.memory_space<vmem>>, %arg4: memref<1x8x1xf32, #tpu.memory_space<vmem>>, %arg5: memref<1x8x1xf32, #tpu.memory_space<vmem>>) attributes {dimension_semantics = [#tpu.dimension_semantics<parallel>, #tpu.dimension_semantics<arbitrary>], iteration_bounds = array<i64: 2, 1>, scalar_prefetch = 0 : i64, scratch_operands = 0 : i64, tpu.core_type = #tpu.core_type<tc>, window_params = [{transform_indices = @transform_0, window_bounds = array<i64: 1, 4, 16>}, {pipeline_mode = #tpu.pipeline_mode<synchronous>, transform_indices = @transform_1, window_bounds = array<i64: 8, 4>}, {transform_indices = @transform_2, window_bounds = array<i64: 1, 8, 1>}, {transform_indices = @transform_3, window_bounds = array<i64: 1, 8, 1>}]} {
    %c0_i32 = arith.constant 0 : i32
    %0 = arith.cmpi eq, %arg1, %c0_i32 : i32
    %1 = arith.extui %0 : i1 to i32
    %c0_i32_0 = arith.constant 0 : i32
    %2 = arith.cmpi ne, %1, %c0_i32_0 : i32
    scf.if %2 {
      %cst_19 = arith.constant 0.000000e+00 : f32
      %24 = vector.broadcast %cst_19 : f32 to vector<8x1xf32>
      %c0_20 = arith.constant 0 : index
      %c0_21 = arith.constant 0 : index
      %c0_22 = arith.constant 0 : index
      %25 = vector.load %arg4[%c0_20, %c0_21, %c0_22] : memref<1x8x1xf32, #tpu.memory_space<vmem>>, vector<1x8x1xf32>
      %26 = vector.shape_cast %25 : vector<1x8x1xf32> to vector<8x1xf32>
      %27 = vector.shape_cast %24 : vector<8x1xf32> to vector<1x8x1xf32>
      tpu.vector_store %arg4[%c0_20, %c0_21, %c0_22], %27 {strides = array<i32>} : memref<1x8x1xf32, #tpu.memory_space<vmem>>, vector<1x8x1xf32>,
      %cst_23 = arith.constant 0.000000e+00 : f32
      %28 = vector.broadcast %cst_23 : f32 to vector<8x1xf32>
      %c0_24 = arith.constant 0 : index
      %c0_25 = arith.constant 0 : index
      %c0_26 = arith.constant 0 : index
      %29 = vector.load %arg5[%c0_24, %c0_25, %c0_26] : memref<1x8x1xf32, #tpu.memory_space<vmem>>, vector<1x8x1xf32>
      %30 = vector.shape_cast %29 : vector<1x8x1xf32> to vector<8x1xf32>
      %31 = vector.shape_cast %28 : vector<8x1xf32> to vector<1x8x1xf32>
      tpu.vector_store %arg5[%c0_24, %c0_25, %c0_26], %31 {strides = array<i32>} : memref<1x8x1xf32, #tpu.memory_space<vmem>>, vector<1x8x1xf32>,
    } else {
    }
    %c0 = arith.constant 0 : index
    %c0_1 = arith.constant 0 : index
    %3 = vector.load %arg3[%c0, %c0_1] : memref<8x4xf32, #tpu.memory_space<vmem>>, vector<8x4xf32>
    %c0_2 = arith.constant 0 : index
    %c0_3 = arith.constant 0 : index
    %c0_4 = arith.constant 0 : index
    %4 = vector.load %arg2[%c0_2, %c0_3, %c0_4] : memref<1x4x16xf32, #tpu.memory_space<vmem>>, vector<1x4x16xf32>
    %5 = vector.shape_cast %4 : vector<1x4x16xf32> to vector<4x16xf32>
    %cst = arith.constant dense<0.000000e+00> : vector<8x16xf32>
    %6 = tpu.matmul %3, %5, %cst {dimension_numbers = #tpu.dot_dimension_numbers<[1], [0], [0], [1], [0, 0, 1, 1], [], []>} : vector<8x4xf32>, vector<4x16xf32>, vector<8x16xf32> -> vector<8x16xf32>
    %c0_5 = arith.constant 0 : index
    %c0_6 = arith.constant 0 : index
    %c0_7 = arith.constant 0 : index
    %7 = vector.load %arg4[%c0_5, %c0_6, %c0_7] : memref<1x8x1xf32, #tpu.memory_space<vmem>>, vector<1x8x1xf32>
    %8 = vector.shape_cast %7 : vector<1x8x1xf32> to vector<8x1xf32>
    %cst_8 = arith.constant dense<0.000000e+00> : vector<8xf32>
    %9 = vector.multi_reduction <add>, %6, %cst_8 [1] : vector<8x16xf32> to vector<8xf32>
    %10 = vector.shape_cast %9 : vector<8xf32> to vector<8x1xf32>
    %11 = arith.addf %8, %10 : vector<8x1xf32>
    %c0_9 = arith.constant 0 : index
    %c0_10 = arith.constant 0 : index
    %c0_11 = arith.constant 0 : index
    %12 = vector.load %arg4[%c0_9, %c0_10, %c0_11] : memref<1x8x1xf32, #tpu.memory_space<vmem>>, vector<1x8x1xf32>
    %13 = vector.shape_cast %12 : vector<1x8x1xf32> to vector<8x1xf32>
    %14 = vector.shape_cast %11 : vector<8x1xf32> to vector<1x8x1xf32>
    tpu.vector_store %arg4[%c0_9, %c0_10, %c0_11], %14 {strides = array<i32>} : memref<1x8x1xf32, #tpu.memory_space<vmem>>, vector<1x8x1xf32>,
    %c0_12 = arith.constant 0 : index
    %c0_13 = arith.constant 0 : index
    %c0_14 = arith.constant 0 : index
    %15 = vector.load %arg5[%c0_12, %c0_13, %c0_14] : memref<1x8x1xf32, #tpu.memory_space<vmem>>, vector<1x8x1xf32>
    %16 = vector.shape_cast %15 : vector<1x8x1xf32> to vector<8x1xf32>
    %17 = arith.mulf %6, %6 : vector<8x16xf32>
    %cst_15 = arith.constant dense<0.000000e+00> : vector<8xf32>
    %18 = vector.multi_reduction <add>, %17, %cst_15 [1] : vector<8x16xf32> to vector<8xf32>
    %19 = vector.shape_cast %18 : vector<8xf32> to vector<8x1xf32>
    %20 = arith.addf %16, %19 : vector<8x1xf32>
    %c0_16 = arith.constant 0 : index
    %c0_17 = arith.constant 0 : index
    %c0_18 = arith.constant 0 : index
    %21 = vector.load %arg5[%c0_16, %c0_17, %c0_18] : memref<1x8x1xf32, #tpu.memory_space<vmem>>, vector<1x8x1xf32>
    %22 = vector.shape_cast %21 : vector<1x8x1xf32> to vector<8x1xf32>
    %23 = vector.shape_cast %20 : vector<8x1xf32> to vector<1x8x1xf32>
    tpu.vector_store %arg5[%c0_16, %c0_17, %c0_18], %23 {strides = array<i32>} : memref<1x8x1xf32, #tpu.memory_space<vmem>>, vector<1x8x1xf32>,
    return
  }
  func.func @transform_0(%arg0: i32, %arg1: i32) -> (i32, i32, i32) {
    %c0_i32 = arith.constant 0 : i32
    %c0_i32_0 = arith.constant 0 : i32
    return %arg0, %c0_i32, %arg1 : i32, i32, i32
  }
  func.func @transform_1(%arg0: i32, %arg1: i32) -> (i32, i32) {
    %c0_i32 = arith.constant 0 : i32
    %c0_i32_0 = arith.constant 0 : i32
    %c0_i32_1 = arith.constant 0 : i32
    return %c0_i32, %c0_i32_0 : i32, i32
  }
  func.func @transform_2(%arg0: i32, %arg1: i32) -> (i32, i32, i32) {
    %c0_i32 = arith.constant 0 : i32
    %c0_i32_0 = arith.constant 0 : i32
    %c0_i32_1 = arith.constant 0 : i32
    return %arg0, %c0_i32, %c0_i32_0 : i32, i32, i32
  }
  func.func @transform_3(%arg0: i32, %arg1: i32) -> (i32, i32, i32) {
    %c0_i32 = arith.constant 0 : i32
    %c0_i32_0 = arith.constant 0 : i32
    %c0_i32_1 = arith.constant 0 : i32
    return %arg0, %c0_i32, %c0_i32_0 : i32, i32, i32
  }
}

</mosaic_0001>

<llo_original>
// kernel: tpu_custom_call.1
$region0: #{tpu_custom_call.1}
  #allocation0 [shape = 'u32[]', space=smem, size = 0x4, offset = 0x4, fixed_abs, tag = 'smem constant byte address 0x4 - core index']
  #allocation1 [shape = 'u32[72,128]{1,0:T(1,128)}', space=vmem, size = 0x9000, scoped, tag = 'internal scratch']
  %s0 = inlined_call_operand.vmem [shape: f32[2,4,16], index: 0, kind: input, shape index: {}]
  %s1 = inlined_call_operand.vmem [shape: f32[8,4], index: 1, kind: input, shape index: {}]
  %s2 = inlined_call_operand.vmem [shape: f32[2,8,1], index: 2, kind: output, shape index: {0}]
  %s3 = inlined_call_operand.vmem [shape: f32[2,8,1], index: 3, kind: output, shape index: {1}]
  %4 = xla_tuple %s2, %s3
  %s5 = sld [smem:[#allocation0]]
  $region53: #{tpu_custom_call.1} parent=0
    _
  %s7 = ssub.s32 1, %s5
  %s8 = scalar_select 0, %s7, %s5
  loop: start=0, step=1, limit=4
  $region2: #{tpu_custom_call.1} parent=0 // loop_pre_header
    _
  $region3: #{tpu_custom_call.1} parent=0 // loop_header
    %s10 = sphi 0, %s14
    %p11 = scmp.ge.s32.totalorder %s10, 4
    %s17 = sphi 0, %s29
    %s18 = sphi 0, %s25
    %s19 = sphi 0, %s17
    %s20 = sphi 0, %s18
    %s21 = sphi 0, %s19
    %s22 = sphi 0, %s20
    %s34 = sphi 0, %s36
    %s37 = sphi 0, %s34
    %s38 = sphi 0, %s37
    %s54 = sphi 0, %s38
    %s58 = sphi 0, %s58
    %s60 = sphi 0, %s58
    %s61 = sphi 0, %s60
    %s75 = sphi 0, %s61
    %s81 = sphi 0, %s83
    %s84 = sphi 0, %s81
    %s85 = sphi 0, %s84
    %s101 = sphi 0, %s85
    %s107 = sphi 0, %s109
    %s110 = sphi 0, %s107
    %s111 = sphi 0, %s110
    %s127 = sphi 0, %s111
  $region4: #{tpu_custom_call.1} parent=0 // loop_header_branch
    %13 = sbr.rel (%p11) target = $region8
  $region5: #{tpu_custom_call.1} parent=0 // loop_body
    %s15 = ssub.s32 %s10, 1
    %s16 = ssub.s32 %s10, 2
    %s23 = sadd.s32 1, %s18
    %p24 = scmp.ge.s32.totalorder %s23, 1
    %s25 = scalar_select %p24, 0, %s23
    %s26 = sadd.s32 1, %s17
    %s27 = scalar_select %p24, %s26, %s17
    %p28 = scmp.ge.s32.totalorder %s27, 2
    %s29 = scalar_select %p28, 0, %s27
    %s30 = ssub.s32 %s17, %s29
    %s31 = ssub.s32 %s18, %s25
    %s32 = sor.u32 %s30, %s31
    %p33 = scmp.eq.s32.totalorder %s32, 0
    %s35 = sadd.s32 %s34, 1
    %s36 = scalar_select %p33, %s34, %s35
    %p39 = pneg %p33
    %p40 = scmp.eq.s32.totalorder %s10, 1
    %p41 = por %p39, %p40
    %p42 = scmp.ne.s32.totalorder %s34, %s37
    %p43 = scmp.eq.s32.totalorder %s10, 0
    %p44 = por %p42, %p43
    %p45 = scmp.ne.s32.totalorder %s34, %s37
    %p46 = scmp.eq.s32.totalorder %s15, 1
    %p47 = por %p45, %p46
    %p48 = scmp.ne.s32.totalorder %s37, %s38
    %p49 = scmp.eq.s32.totalorder %s15, 0
    %p50 = por %p48, %p49
    %p51 = scmp.ne.s32.totalorder %s37, %s38
    %p52 = scmp.eq.s32.totalorder %s16, 1
    %p53 = por %p51, %p52
    %p55 = scmp.ne.s32.totalorder %s38, %s54
    %p56 = scmp.eq.s32.totalorder %s16, 0
    %p57 = por %p55, %p56
    %s59 = sadd.s32 %s58, 1
    %p62 = scmp.eq.s32.totalorder %s10, 1
    %p63 = scmp.ne.s32.totalorder %s58, %s60
    %p64 = scmp.eq.s32.totalorder %s10, 0
    %p65 = por %p63, %p64
    %p66 = scmp.ne.s32.totalorder %s58, %s60
    %p67 = scmp.eq.s32.totalorder %s15, 1
    %p68 = por %p66, %p67
    %p69 = scmp.ne.s32.totalorder %s60, %s61
    %p70 = scmp.eq.s32.totalorder %s15, 0
    %p71 = por %p69, %p70
    %p72 = scmp.ne.s32.totalorder %s60, %s61
    %p73 = scmp.eq.s32.totalorder %s16, 1
    %p74 = por %p72, %p73
    %p76 = scmp.ne.s32.totalorder %s61, %s75
    %p77 = scmp.eq.s32.totalorder %s16, 0
    %p78 = por %p76, %p77
    %s79 = ssub.s32 %s17, %s29
    %p80 = scmp.eq.s32.totalorder %s79, 0
    %s82 = sadd.s32 %s81, 1
    %s83 = scalar_select %p80, %s81, %s82
    %p86 = pneg %p80
    %p87 = scmp.eq.s32.totalorder %s10, 1
    %p88 = por %p86, %p87
    %p89 = scmp.ne.s32.totalorder %s81, %s84
    %p90 = scmp.eq.s32.totalorder %s10, 0
    %p91 = por %p89, %p90
    %p92 = scmp.ne.s32.totalorder %s81, %s84
    %p93 = scmp.eq.s32.totalorder %s15, 1
    %p94 = por %p92, %p93
    %p95 = scmp.ne.s32.totalorder %s84, %s85
    %p96 = scmp.eq.s32.totalorder %s15, 0
    %p97 = por %p95, %p96
    %p98 = scmp.ne.s32.totalorder %s84, %s85
    %p99 = scmp.eq.s32.totalorder %s16, 1
    %p100 = por %p98, %p99
    %p102 = scmp.ne.s32.totalorder %s85, %s101
    %p103 = scmp.eq.s32.totalorder %s16, 0
    %p104 = por %p102, %p103
    %s105 = ssub.s32 %s17, %s29
    %p106 = scmp.eq.s32.totalorder %s105, 0
    %s108 = sadd.s32 %s107, 1
    %s109 = scalar_select %p106, %s107, %s108
    %p112 = pneg %p106
    %p113 = scmp.eq.s32.totalorder %s10, 1
    %p114 = por %p112, %p113
    %p115 = scmp.ne.s32.totalorder %s107, %s110
    %p116 = scmp.eq.s32.totalorder %s10, 0
    %p117 = por %p115, %p116
    %p118 = scmp.ne.s32.totalorder %s107, %s110
    %p119 = scmp.eq.s32.totalorder %s15, 1
    %p120 = por %p118, %p119
    %p121 = scmp.ne.s32.totalorder %s110, %s111
    %p122 = scmp.eq.s32.totalorder %s15, 0
    %p123 = por %p121, %p122
    %p124 = scmp.ne.s32.totalorder %s110, %s111
    %p125 = scmp.eq.s32.totalorder %s16, 1
    %p126 = por %p124, %p125
    %p128 = scmp.ne.s32.totalorder %s111, %s127
    %p129 = scmp.eq.s32.totalorder %s16, 0
    %p130 = por %p128, %p129
    %p131 = scmp.le.s32.totalorder 1, %s10
    %p132 = scmp.lt.s32.totalorder %s10, 3
    %p133 = pnand %p131, %p132
    %p134 = pneg %p133
    // Predicated region
    $region9: #{tpu_custom_call.1} parent=5 // pred_check
      _
    $region10: #{tpu_custom_call.1} parent=5 // pred_check_branch
      %136 = sbr.rel (%p133) target = $region12
    $region11: #{tpu_custom_call.1} parent=5 // pred_region
      %s137 = ssub.s32 %s10, 1
      // Predicated region
      $region13: #{tpu_custom_call.1} parent=11 // pred_check
        %p138 = pneg %p71
      $region14: #{tpu_custom_call.1} parent=11 // pred_check_branch
        %140 = sbr.rel (%p138) target = $region16
      $region15: #{tpu_custom_call.1} parent=11 // pred_region
        _
      $region16: #{tpu_custom_call.1} parent=11 // pred_fallthru
        _
    $region12: #{tpu_custom_call.1} parent=5 // pred_fallthru
      _
    %p141 = scmp.lt.s32.totalorder %s10, 2
    // Predicated region
    $region17: #{tpu_custom_call.1} parent=5 // pred_check
      %p142 = pneg %p141
    $region18: #{tpu_custom_call.1} parent=5 // pred_check_branch
      %144 = sbr.rel (%p142) target = $region20
    $region19: #{tpu_custom_call.1} parent=5 // pred_region
      // Predicated region
      $region21: #{tpu_custom_call.1} parent=19 // pred_check
        %p145 = pneg %p44
      $region22: #{tpu_custom_call.1} parent=19 // pred_check_branch
        %147 = sbr.rel (%p145) target = $region24
      $region23: #{tpu_custom_call.1} parent=19 // pred_region
        %p148 = scmp.lt.s32.totalorder %s17, 1
        %s149 = scalar_select %p148, %s17, 1
        %p150 = scmp.lt.s32.totalorder %s18, 0
        %s151 = scalar_select %p150, %s18, 0
        %s152 = sadd.s32 %s151, %s149
        %s153 = smul.addr %s152, 4
        %s154 = scalar_lea.vmem %s0, %s153
      $region24: #{tpu_custom_call.1} parent=19 // pred_fallthru
        _
    $region20: #{tpu_custom_call.1} parent=5 // pred_fallthru
      _
    %p155 = scmp.le.s32.totalorder 1, %s10
    %p156 = scmp.lt.s32.totalorder %s10, 3
    %p157 = pnand %p155, %p156
    %p158 = pneg %p157
    // Predicated region
    $region25: #{tpu_custom_call.1} parent=5 // pred_check
      _
    $region26: #{tpu_custom_call.1} parent=5 // pred_check_branch
      %160 = sbr.rel (%p157) target = $region28
    $region27: #{tpu_custom_call.1} parent=5 // pred_region
      %s161 = ssub.s32 %s10, 1
      %p162 = scmp.lt.s32.totalorder %s19, 1
      %s163 = scalar_select %p162, %s19, 1
      %p164 = scmp.lt.s32.totalorder %s20, 0
      %s165 = scalar_select %p164, %s20, 0
      %s166 = sadd.s32 %s165, %s163
      %s167 = smul.addr %s166, 4
      %s168 = scalar_lea.vmem %s0, %s167
      %p169 = pneg %p50
      %p170 = pneg %p47
      %p171 = pneg %p71
      %p172 = pneg %p68
      %p173 = pneg %p97
      %p174 = pneg %p94
      %p175 = scmp.lt.s32.totalorder %s19, 1
      %s176 = scalar_select %p175, %s19, 1
      %s177 = smul.addr %s176, 8
      %s178 = scalar_lea.vmem %s2, %s177
      %p179 = pneg %p123
      %p180 = pneg %p120
      %p181 = scmp.lt.s32.totalorder %s19, 1
      %s182 = scalar_select %p181, %s19, 1
      %s183 = smul.addr %s182, 8
      %s184 = scalar_lea.vmem %s3, %s183
      %p185 = scmp.lt.s32.totalorder %s19, 1
      %s186 = scalar_select %p185, %s19, 1
      %p187 = scmp.lt.s32.totalorder %s20, 0
      %s188 = scalar_select %p187, %s20, 0
      %s189 = sadd.s32 %s188, %s186
      %s190 = smul.addr %s189, 4
      %s191 = scalar_lea.vmem %s0, %s190
      %p192 = scmp.lt.s32.totalorder %s19, 1
      %s193 = scalar_select %p192, %s19, 1
      %s194 = smul.addr %s193, 8
      %s195 = scalar_lea.vmem %s2, %s194
      %p196 = scmp.lt.s32.totalorder %s19, 1
      %s197 = scalar_select %p196, %s19, 1
      %s198 = smul.addr %s197, 8
      %s199 = scalar_lea.vmem %s3, %s198
      %p200 = scmp.eq.s32.totalorder %s20, 0
      // Predicated region
      $region29: #{tpu_custom_call.1} parent=27 // pred_check
        %p201 = pneg %p200
      $region30: #{tpu_custom_call.1} parent=27 // pred_check_branch
        %203 = sbr.rel (%p201) target = $region32
      $region31: #{tpu_custom_call.1} parent=27 // pred_region
        %vm204 = vcmask 7168
        %205 = vst.msk [vmem:[%s195] sm:$0xff] %vm204, 0.0
        %206 = vst.msk [vmem:[%s199] sm:$0xff] %vm204, 0.0
      $region32: #{tpu_custom_call.1} parent=27 // pred_fallthru
        _
      %v207 = vld [vmem:[%s1] sm:$0xff]
      %v208 = vld [vmem:[%s191] sm:$0xf]
      %vm209 = vcmask 31744
      %v211 = vsel %vm209, %v207, 0
      %vm213 = vcmask 1043456
      %v215 = vsel %vm213, %v208, 0
      %217 = vmatpush.msra.mxu0 0.0
      %218 = vmatpush.msra.mxu0 0.0
      %219 = vmatpush.msra.mxu0 0.0
      %220 = vmatpush.msra.mxu0 0.0
      %221 = vmatpush.msra.mxu0 0.0
      %222 = vmatpush.msra.mxu0 0.0
      %223 = vmatpush.msra.mxu0 0.0
      %224 = vmatpush.msra.mxu0 0.0
      %225 = vmatpush.msra.mxu0 0.0
      %226 = vmatpush.msra.mxu0 0.0
      %227 = vmatpush.msra.mxu0 0.0
      %228 = vmatpush.msra.mxu0 0.0
      %229 = vmatpush.msra.mxu0 0.0
      %230 = vmatpush.msra.mxu0 0.0
      %231 = vmatpush.msra.mxu0 0.0
      %232 = vmatpush.msra.mxu0 %v215
      %233 = vmatmul.f32.gmra.mxu0 %v211
      %v234 = vpop.f32.mrf.mxu0
      %v235 = vadd.f32 0.0, %v234
      %236 = vdwg.mxu0
      %v237 = vld [vmem:[%s195] sm:$0xff]
      %vm238 = vcmask 130048
      %v239 = vsel %vm238, %v235, 0.0
      %240 = vadd.xlane.f32.xlu0 %v239
      %v241 = vpop.xlane.xlu0 %240
      %v242 = vadd.f32 %v237, %v241
      %vm243 = vcmask 7168
      %244 = vst.msk [vmem:[%s195] sm:$0xff] %vm243, %v242
      %v245 = vld [vmem:[%s199] sm:$0xff]
      %v246 = vmul.f32 %v235, %v235
      %v247 = vsel %vm238, %v246, 0.0
      %248 = vadd.xlane.f32.xlu0 %v247
      %v249 = vpop.xlane.xlu0 %248
      %v250 = vadd.f32 %v245, %v249
      %251 = vst.msk [vmem:[%s199] sm:$0xff] %vm243, %v250
      %p252 = scmp.lt.s32.totalorder %s19, 1
      %s253 = scalar_select %p252, %s19, 1
      %s254 = smul.addr %s253, 8
      %s255 = scalar_lea.vmem %s2, %s254
      %p256 = scmp.lt.s32.totalorder %s19, 1
      %s257 = scalar_select %p256, %s19, 1
      %s258 = smul.addr %s257, 8
      %s259 = scalar_lea.vmem %s3, %s258
      // Predicated region
      $region33: #{tpu_custom_call.1} parent=27 // pred_check
        %p260 = pneg %p94
      $region34: #{tpu_custom_call.1} parent=27 // pred_check_branch
        %262 = sbr.rel (%p260) target = $region36
      $region35: #{tpu_custom_call.1} parent=27 // pred_region
        _
      $region36: #{tpu_custom_call.1} parent=27 // pred_fallthru
        _
      // Predicated region
      $region37: #{tpu_custom_call.1} parent=27 // pred_check
        %p263 = pneg %p120
      $region38: #{tpu_custom_call.1} parent=27 // pred_check_branch
        %265 = sbr.rel (%p263) target = $region40
      $region39: #{tpu_custom_call.1} parent=27 // pred_region
        _
      $region40: #{tpu_custom_call.1} parent=27 // pred_fallthru
        _
    $region28: #{tpu_custom_call.1} parent=5 // pred_fallthru
      _
    %p266 = scmp.le.s32.totalorder 2, %s10
    // Predicated region
    $region41: #{tpu_custom_call.1} parent=5 // pred_check
      %p267 = pneg %p266
    $region42: #{tpu_custom_call.1} parent=5 // pred_check_branch
      %269 = sbr.rel (%p267) target = $region44
    $region43: #{tpu_custom_call.1} parent=5 // pred_region
      %s270 = ssub.s32 %s10, 2
      // Predicated region
      $region45: #{tpu_custom_call.1} parent=43 // pred_check
        %p271 = pneg %p100
      $region46: #{tpu_custom_call.1} parent=43 // pred_check_branch
        %273 = sbr.rel (%p271) target = $region48
      $region47: #{tpu_custom_call.1} parent=43 // pred_region
        %p274 = scmp.lt.s32.totalorder %s21, 1
        %s275 = scalar_select %p274, %s21, 1
        %s276 = smul.addr %s275, 8
        %s277 = scalar_lea.vmem %s2, %s276
      $region48: #{tpu_custom_call.1} parent=43 // pred_fallthru
        _
      // Predicated region
      $region49: #{tpu_custom_call.1} parent=43 // pred_check
        %p278 = pneg %p126
      $region50: #{tpu_custom_call.1} parent=43 // pred_check_branch
        %280 = sbr.rel (%p278) target = $region52
      $region51: #{tpu_custom_call.1} parent=43 // pred_region
        %p281 = scmp.lt.s32.totalorder %s21, 1
        %s282 = scalar_select %p281, %s21, 1
        %s283 = smul.addr %s282, 8
        %s284 = scalar_lea.vmem %s3, %s283
      $region52: #{tpu_custom_call.1} parent=43 // pred_fallthru
        _
    $region44: #{tpu_custom_call.1} parent=5 // pred_fallthru
      _
  $region6: #{tpu_custom_call.1} parent=0 // loop_footer
    %s14 = sadd.s32 1, %s10
  $region7: #{tpu_custom_call.1} parent=0 // loop_footer_branch
    %9 = sbr.rel target = $region3
  $region8: #{tpu_custom_call.1} parent=0 // loop_exit
    _

</llo_original>
